<compile_context>
chip_gen: v7x
topology: tpu7x:2x2x1
jax: 0.10.0
libtpu: 0.0.40
codegen_flags: <defaults>
</compile_context>

<pallas_src>
import jax
import jax.numpy as jnp
from jax.experimental import pallas as pl
from jax.experimental.pallas import tpu as pltpu


def _round_up(x, m):
    return ((x + m - 1) // m) * m


# ----------------------------- Pallas kernel ---------------------------------
def _conv_bn_hswish_kernel(a_ref, w_ref, bias_ref, o_ref, acc_ref):
    # a_ref:    (tm, tk)  bf16 im2col patch tile
    # w_ref:    (tk, tn)  bf16 conv weight with BN scale folded in
    # bias_ref: (1,  tn)  f32  folded-BN bias
    # o_ref:    (tm, tn)  f32  output tile
    # acc_ref:  (tm, tn)  f32  accumulator scratch (lives across the K axis)
    @pl.when(pl.program_id(2) == 0)
    def _init():
        acc_ref[...] = jnp.zeros_like(acc_ref)

    acc_ref[...] += jnp.dot(a_ref[...], w_ref[...],
                            preferred_element_type=jnp.float32)

    @pl.when(pl.program_id(2) == pl.num_programs(2) - 1)
    def _finalize():
        y = acc_ref[...] + bias_ref[...]
        # Hardswish: y * relu6(y + 3) / 6   (f32 epilogue; safe on v5e too)
        o_ref[...] = (y * jnp.clip(y + 3.0, 0.0, 6.0) * (1.0 / 6.0)).astype(o_ref.dtype)


def _fused_matmul_bn_hswish(cols, w2d, bias, *, tm=512):
    """cols: (M, K) bf16, w2d: (K, Cp) bf16, bias: (1, Cp) f32; Cp % 128 == 0."""
    M, K = cols.shape
    Cp = w2d.shape[1]

    # --- tile sizes -----------------------------------------------------------
    M128 = _round_up(M, 128)
    tm = min(tm, M128)
    if M128 >= 2 * 128 and M128 <= tm:
        # Prefer >= 2 grid steps along M so both v7x TensorCores get work.
        tm = _round_up(M128 // 2, 128)
    tn = 256 if Cp % 256 == 0 else 128
    if K <= 2048:
        tk, Kp = K, K                   # full-K block (exempt from 128 rule)
    else:
        tk = 512
        Kp = _round_up(K, tk)

    M_pad = _round_up(M, tm)
    if M_pad != M or Kp != K:
        cols = jnp.pad(cols, ((0, M_pad - M), (0, Kp - K)))
    if Kp != K:
        w2d = jnp.pad(w2d, ((0, Kp - K), (0, 0)))

    grid = (M_pad // tm, Cp // tn, Kp // tk)

    # VMEM budget: double-buffered inputs/outputs + f32 accumulator.
    itm = cols.dtype.itemsize
    footprint = (2 * (tm * tk + tk * tn) * itm
                 + 2 * tn * 4 + 2 * tm * tn * 4 + tm * tn * 4)
    vmem_limit = int(min(64 * 2**20, max(32 * 2**20, 4 * footprint)))

    cost = pl.CostEstimate(
        flops=2 * M_pad * Kp * Cp,
        transcendentals=0,
        bytes_accessed=(M_pad * Kp * itm + Kp * Cp * itm
                        + Cp * 4 + M_pad * Cp * 4),
    )

    out = pl.pallas_call(
        _conv_bn_hswish_kernel,
        out_shape=jax.ShapeDtypeStruct((M_pad, Cp), jnp.float32),
        grid_spec=pltpu.PrefetchScalarGridSpec(
            num_scalar_prefetch=0,
            grid=grid,
            in_specs=[
                pl.BlockSpec((tm, tk), lambda i, j, k: (i, k)),
                pl.BlockSpec((tk, tn), lambda i, j, k: (k, j)),
                pl.BlockSpec((1, tn), lambda i, j, k: (0, j)),
            ],
            out_specs=pl.BlockSpec((tm, tn), lambda i, j, k: (i, j)),
            scratch_shapes=[pltpu.VMEM((tm, tn), jnp.float32)],
        ),
        compiler_params=pltpu.CompilerParams(
            dimension_semantics=("parallel", "parallel", "arbitrary"),
            vmem_limit_bytes=vmem_limit,
        ),
        cost_estimate=cost,
    )(cols, w2d, bias)
    return out[:M]


# ------------------------------- Wrapper --------------------------------------
def conv_norm_activation_block(x_nchw, weight, bn_gamma, bn_beta, bn_mean, bn_var,
                               *, stride=1, padding=0, eps=1e-5,
                               compute_dtype=jnp.bfloat16, tm=512):
    """Forward pass of ConvNormActivationBlock (groups=1, bias=False, Hardswish).

    x_nchw: (N, Cin, H, W)     weight: (Cout, Cin, kh, kw)
    returns: (N, Cout, Ho, Wo) float32
    """
    N, Cin, H, W = x_nchw.shape
    Cout, Cin_w, kh, kw = weight.shape
    assert Cin == Cin_w, "groups != 1 not supported in this kernel"

    Ho = (H + 2 * padding - kh) // stride + 1
    Wo = (W + 2 * padding - kw) // stride + 1

    # NCHW -> NHWC (glue).  Cast to the bf16 MXU dtype early so the pad and the
    # im2col buffer move half the bytes.
    x = jnp.transpose(x_nchw, (0, 2, 3, 1)).astype(compute_dtype)
    x = jnp.pad(x, ((0, 0), (padding, padding), (padding, padding), (0, 0)))

    # im2col: ordering (kh, kw, Cin) along the reduction axis.
    patches = []
    for i in range(kh):
        for j in range(kw):
            patches.append(
                x[:, i:i + Ho * stride:stride, j:j + Wo * stride:stride, :]
            )
    cols = jnp.concatenate(patches, axis=-1)            # (N, Ho, Wo, kh*kw*Cin)
    cols = cols.reshape(N * Ho * Wo, kh * kw * Cin)     # (M, K) bf16

    # Fold eval-mode BatchNorm: scale goes into the weight, bias stays per-channel.
    scale = (bn_gamma / jnp.sqrt(bn_var + eps)).astype(jnp.float32)        # (Cout,)
    bias = (bn_beta - bn_mean * scale).astype(jnp.float32)                 # (Cout,)

    # Weight (Cout, Cin, kh, kw) -> (kh, kw, Cin, Cout) -> (K, Cout), scale folded.
    w2d = jnp.transpose(weight, (2, 3, 1, 0)).reshape(kh * kw * Cin, Cout)
    w2d = w2d.astype(jnp.float32) * scale[None, :]

    # Lane-dense output: pad Cout to a multiple of 128 so all stores are unmasked.
    Cp = _round_up(Cout, 128)
    if Cp != Cout:
        w2d = jnp.pad(w2d, ((0, 0), (0, Cp - Cout)))
        bias = jnp.pad(bias, (0, Cp - Cout))
    w2d = w2d.astype(compute_dtype)
    bias = bias.reshape(1, Cp)

    out = _fused_matmul_bn_hswish(cols, w2d, bias, tm=tm)   # (M, Cp) f32
    out = out[:, :Cout].reshape(N, Ho, Wo, Cout)
    return jnp.transpose(out, (0, 3, 1, 2))                 # back to NCHW


# ------------------------------ Reference (checks) ----------------------------
def _reference(x_nchw, weight, bn_gamma, bn_beta, bn_mean, bn_var,
               *, stride=1, padding=0, eps=1e-5):
    y = jax.lax.conv_general_dilated(
        x_nchw, weight, window_strides=(stride, stride),
        padding=[(padding, padding), (padding, padding)],
        dimension_numbers=("NCHW", "OIHW", "NCHW"))
    scale = (bn_gamma / jnp.sqrt(bn_var + eps)).reshape(1, -1, 1, 1)
    bias = (bn_beta - bn_mean * bn_gamma / jnp.sqrt(bn_var + eps)).reshape(1, -1, 1, 1)
    y = y * scale + bias
    return y * jnp.clip(y + 3.0, 0.0, 6.0) / 6.0


if __name__ == "__main__":
    # Small shapes consistent with the module: in=4, out=8, k=3, stride=1, pad=1.
    key = jax.random.PRNGKey(0)
    k_x, k_w = jax.random.split(key, 2)

    N, Cin, H, W = 2, 4, 16, 16
    Cout, kh, kw = 8, 3, 3
    stride, padding = 1, 1

    x = jax.random.normal(k_x, (N, Cin, H, W), dtype=jnp.float32)
    weight = jax.random.normal(k_w, (Cout, Cin, kh, kw), dtype=jnp.float32) * 0.1
    # PyTorch default BatchNorm2d init: gamma=1, beta=0, running_mean=0, running_var=1.
    bn_gamma = jnp.ones((Cout,), jnp.float32)
    bn_beta = jnp.zeros((Cout,), jnp.float32)
    bn_mean = jnp.zeros((Cout,), jnp.float32)
    bn_var = jnp.ones((Cout,), jnp.float32)

    out = conv_norm_activation_block(x, weight, bn_gamma, bn_beta, bn_mean, bn_var,
                                     stride=stride, padding=padding)
    out = jax.block_until_ready(out)

    ref = _reference(x, weight, bn_gamma, bn_beta, bn_mean, bn_var,
                     stride=stride, padding=padding)
    assert out.shape == (N, Cout, H, W)
    err = float(jnp.max(jnp.abs(out - ref)))
    # bf16 MXU operands -> looser tolerance than the pure-f32 variant.
    assert err < 3e-2, f"max abs err {err}"

    print("KERNEL_OK")
</pallas_src>

<mosaic_0001>
module attributes {stable_mosaic.version = 11 : i64} {
  func.func @_conv_bn_hswish_kernel(%arg0: i32, %arg1: i32, %arg2: i32, %arg3: memref<256x36xbf16, #tpu.memory_space<vmem>>, %arg4: memref<36x128xbf16, #tpu.memory_space<vmem>>, %arg5: memref<1x128xf32, #tpu.memory_space<vmem>>, %arg6: memref<256x128xf32, #tpu.memory_space<vmem>>, %arg7: memref<256x128xf32, #tpu.memory_space<vmem>>) attributes {dimension_semantics = [#tpu.dimension_semantics<parallel>, #tpu.dimension_semantics<parallel>, #tpu.dimension_semantics<arbitrary>], iteration_bounds = array<i64: 2, 1, 1>, scalar_prefetch = 0 : i64, scratch_operands = 1 : i64, tpu.core_type = #tpu.core_type<tc>, window_params = [{transform_indices = @transform_0, window_bounds = array<i64: 256, 36>}, {transform_indices = @transform_1, window_bounds = array<i64: 36, 128>}, {transform_indices = @transform_2, window_bounds = array<i64: 1, 128>}, {transform_indices = @transform_3, window_bounds = array<i64: 256, 128>}]} {
    %c0_i32 = arith.constant 0 : i32
    %0 = arith.cmpi eq, %arg2, %c0_i32 : i32
    %1 = arith.extui %0 : i1 to i32
    %c0_i32_0 = arith.constant 0 : i32
    %2 = arith.cmpi ne, %1, %c0_i32_0 : i32
    scf.if %2 {
      %cst_10 = arith.constant 0.000000e+00 : f32
      %12 = vector.broadcast %cst_10 : f32 to vector<256x128xf32>
      %c0_11 = arith.constant 0 : index
      %c0_12 = arith.constant 0 : index
      %13 = vector.load %arg7[%c0_11, %c0_12] : memref<256x128xf32, #tpu.memory_space<vmem>>, vector<256x128xf32>
      tpu.vector_store %arg7[%c0_11, %c0_12], %12 {strides = array<i32>} : memref<256x128xf32, #tpu.memory_space<vmem>>, vector<256x128xf32>,
    } else {
    }
    %c0 = arith.constant 0 : index
    %c0_1 = arith.constant 0 : index
    %3 = vector.load %arg7[%c0, %c0_1] : memref<256x128xf32, #tpu.memory_space<vmem>>, vector<256x128xf32>
    %c0_2 = arith.constant 0 : index
    %c0_3 = arith.constant 0 : index
    %4 = vector.load %arg3[%c0_2, %c0_3] : memref<256x36xbf16, #tpu.memory_space<vmem>>, vector<256x36xbf16>
    %c0_4 = arith.constant 0 : index
    %c0_5 = arith.constant 0 : index
    %5 = vector.load %arg4[%c0_4, %c0_5] : memref<36x128xbf16, #tpu.memory_space<vmem>>, vector<36x128xbf16>
    %cst = arith.constant dense<0.000000e+00> : vector<256x128xf32>
    %6 = tpu.matmul %4, %5, %cst {dimension_numbers = #tpu.dot_dimension_numbers<[1], [0], [0], [1], [0, 0, 1, 1], [], []>} : vector<256x36xbf16>, vector<36x128xbf16>, vector<256x128xf32> -> vector<256x128xf32>
    %7 = arith.addf %3, %6 : vector<256x128xf32>
    %c0_6 = arith.constant 0 : index
    %c0_7 = arith.constant 0 : index
    %8 = vector.load %arg7[%c0_6, %c0_7] : memref<256x128xf32, #tpu.memory_space<vmem>>, vector<256x128xf32>
    tpu.vector_store %arg7[%c0_6, %c0_7], %7 {strides = array<i32>} : memref<256x128xf32, #tpu.memory_space<vmem>>, vector<256x128xf32>,
    %c0_i32_8 = arith.constant 0 : i32
    %9 = arith.cmpi eq, %arg2, %c0_i32_8 : i32
    %10 = arith.extui %9 : i1 to i32
    %c0_i32_9 = arith.constant 0 : i32
    %11 = arith.cmpi ne, %10, %c0_i32_9 : i32
    scf.if %11 {
      %c0_10 = arith.constant 0 : index
      %c0_11 = arith.constant 0 : index
      %12 = vector.load %arg7[%c0_10, %c0_11] : memref<256x128xf32, #tpu.memory_space<vmem>>, vector<256x128xf32>
      %c0_12 = arith.constant 0 : index
      %c0_13 = arith.constant 0 : index
      %13 = vector.load %arg5[%c0_12, %c0_13] : memref<1x128xf32, #tpu.memory_space<vmem>>, vector<1x128xf32>
      %14 = vector.broadcast %13 : vector<1x128xf32> to vector<256x128xf32>
      %15 = arith.addf %12, %14 : vector<256x128xf32>
      %cst_14 = arith.constant 3.000000e+00 : f32
      %16 = vector.broadcast %cst_14 : f32 to vector<256x128xf32>
      %17 = arith.addf %15, %16 : vector<256x128xf32>
      %cst_15 = arith.constant 0.000000e+00 : f32
      %cst_16 = arith.constant 6.000000e+00 : f32
      %18 = vector.broadcast %cst_15 : f32 to vector<256x128xf32>
      %19 = arith.maximumf %18, %17 : vector<256x128xf32>
      %20 = vector.broadcast %cst_16 : f32 to vector<256x128xf32>
      %21 = arith.minimumf %20, %19 : vector<256x128xf32>
      %22 = arith.mulf %15, %21 : vector<256x128xf32>
      %cst_17 = arith.constant 0.166666672 : f32
      %23 = vector.broadcast %cst_17 : f32 to vector<256x128xf32>
      %24 = arith.mulf %22, %23 : vector<256x128xf32>
      %c0_18 = arith.constant 0 : index
      %c0_19 = arith.constant 0 : index
      %25 = vector.load %arg6[%c0_18, %c0_19] : memref<256x128xf32, #tpu.memory_space<vmem>>, vector<256x128xf32>
      tpu.vector_store %arg6[%c0_18, %c0_19], %24 {strides = array<i32>} : memref<256x128xf32, #tpu.memory_space<vmem>>, vector<256x128xf32>,
    } else {
    }
    return
  }
  func.func @transform_0(%arg0: i32, %arg1: i32, %arg2: i32) -> (i32, i32) {
    %c0_i32 = arith.constant 0 : i32
    return %arg0, %arg2 : i32, i32
  }
  func.func @transform_1(%arg0: i32, %arg1: i32, %arg2: i32) -> (i32, i32) {
    %c0_i32 = arith.constant 0 : i32
    return %arg2, %arg1 : i32, i32
  }
  func.func @transform_2(%arg0: i32, %arg1: i32, %arg2: i32) -> (i32, i32) {
    %c0_i32 = arith.constant 0 : i32
    %c0_i32_0 = arith.constant 0 : i32
    return %c0_i32, %arg1 : i32, i32
  }
  func.func @transform_3(%arg0: i32, %arg1: i32, %arg2: i32) -> (i32, i32) {
    %c0_i32 = arith.constant 0 : i32
    return %arg0, %arg1 : i32, i32
  }
}

</mosaic_0001>

<llo_original>
// kernel: tpu_custom_call.1
$region0: #{tpu_custom_call.1}
  #allocation0 [shape = 'u32[]', space=smem, size = 0x4, offset = 0x4, fixed_abs, tag = 'smem constant byte address 0x4 - core index']
  #allocation1 [shape = 'u32[144,128]{1,0:T(1,128)}', space=vmem, size = 0x12000, scoped, tag = 'internal scratch']
  #allocation2 [shape = 'f32[256,128]{1,0:T(8,128)}', space=vmem, size = 0x20000, scoped, tag = 'scratch operand']
  %s0 = inlined_call_operand.vmem [shape: bf16[512,36], index: 0, kind: input, shape index: {}]
  %s1 = inlined_call_operand.vmem [shape: bf16[36,128], index: 1, kind: input, shape index: {}]
  %s2 = inlined_call_operand.vmem [shape: f32[1,128], index: 2, kind: input, shape index: {}]
  %s3 = inlined_call_operand.hbm [shape: f32[512,128], index: 3, kind: output, shape index: {}]
  %s4 = sld [smem:[#allocation0]]
  $region53: #{tpu_custom_call.1} parent=0
    _
  %s6 = ssub.s32 1, %s4
  %s7 = scalar_select 0, %s6, %s4
  $region1: #{tpu_custom_call.1} parent=0
    #allocation3 [shape = 'u8[262144]{0}', space=vmem, size = 0x40000, scoped, tag = 'output window, operand 0']
    #allocation4 [shape = 's32[2]{0}', space=sflag, size = 0x8, scoped, tag = 'scoped memory for tpu_custom_call.1']
    %8 = vsyncpa [#allocation4], 0
    %s9 = scalar_lea.sflag [#allocation4], 1
    %10 = vsyncpa %s9, 0
    loop: start=0, step=1, limit=4
    $region2: #{tpu_custom_call.1} parent=1 // loop_pre_header
      _
    $region3: #{tpu_custom_call.1} parent=1 // loop_header
      %s12 = sphi 0, %s16
      %p13 = scmp.ge.s32.totalorder %s12, 4
      %s19 = sphi 0, %s38
      %s20 = sphi 0, %s34
      %s21 = sphi 0, %s30
      %s22 = sphi 0, %s19
      %s23 = sphi 0, %s20
      %s24 = sphi 0, %s21
      %s25 = sphi 0, %s22
      %s26 = sphi 0, %s23
      %s27 = sphi 0, %s24
      %s43 = sphi 0, %s45
      %s46 = sphi 0, %s43
      %s47 = sphi 0, %s46
      %s63 = sphi 0, %s47
      %s71 = sphi 0, %s73
      %s74 = sphi 0, %s71
      %s75 = sphi 0, %s74
      %s91 = sphi 0, %s75
      %s97 = sphi 0, %s99
      %s100 = sphi 0, %s97
      %s101 = sphi 0, %s100
      %s117 = sphi 0, %s101
      %s125 = sphi 0, %s127
      %s128 = sphi 0, %s125
      %s129 = sphi 0, %s128
      %s145 = sphi 0, %s129
    $region4: #{tpu_custom_call.1} parent=1 // loop_header_branch
      %15 = sbr.rel (%p13) target = $region8
    $region5: #{tpu_custom_call.1} parent=1 // loop_body
      %s17 = ssub.s32 %s12, 1
      %s18 = ssub.s32 %s12, 2
      %s28 = sadd.s32 1, %s21
      %p29 = scmp.ge.s32.totalorder %s28, 1
      %s30 = scalar_select %p29, 0, %s28
      %s31 = sadd.s32 1, %s20
      %s32 = scalar_select %p29, %s31, %s20
      %p33 = scmp.ge.s32.totalorder %s32, 1
      %s34 = scalar_select %p33, 0, %s32
      %s35 = sadd.s32 1, %s19
      %s36 = scalar_select %p33, %s35, %s19
      %p37 = scmp.ge.s32.totalorder %s36, 2
      %s38 = scalar_select %p37, 0, %s36
      %s39 = ssub.s32 %s19, %s38
      %s40 = ssub.s32 %s21, %s30
      %s41 = sor.u32 %s39, %s40
      %p42 = scmp.eq.s32.totalorder %s41, 0
      %s44 = sadd.s32 %s43, 1
      %s45 = scalar_select %p42, %s43, %s44
      %p48 = pneg %p42
      %p49 = scmp.eq.s32.totalorder %s12, 1
      %p50 = por %p48, %p49
      %p51 = scmp.ne.s32.totalorder %s43, %s46
      %p52 = scmp.eq.s32.totalorder %s12, 0
      %p53 = por %p51, %p52
      %p54 = scmp.ne.s32.totalorder %s43, %s46
      %p55 = scmp.eq.s32.totalorder %s17, 1
      %p56 = por %p54, %p55
      %p57 = scmp.ne.s32.totalorder %s46, %s47
      %p58 = scmp.eq.s32.totalorder %s17, 0
      %p59 = por %p57, %p58
      %p60 = scmp.ne.s32.totalorder %s46, %s47
      %p61 = scmp.eq.s32.totalorder %s18, 1
      %p62 = por %p60, %p61
      %p64 = scmp.ne.s32.totalorder %s47, %s63
      %p65 = scmp.eq.s32.totalorder %s18, 0
      %p66 = por %p64, %p65
      %s67 = ssub.s32 %s21, %s30
      %s68 = ssub.s32 %s20, %s34
      %s69 = sor.u32 %s67, %s68
      %p70 = scmp.eq.s32.totalorder %s69, 0
      %s72 = sadd.s32 %s71, 1
      %s73 = scalar_select %p70, %s71, %s72
      %p76 = pneg %p70
      %p77 = scmp.eq.s32.totalorder %s12, 1
      %p78 = por %p76, %p77
      %p79 = scmp.ne.s32.totalorder %s71, %s74
      %p80 = scmp.eq.s32.totalorder %s12, 0
      %p81 = por %p79, %p80
      %p82 = scmp.ne.s32.totalorder %s71, %s74
      %p83 = scmp.eq.s32.totalorder %s17, 1
      %p84 = por %p82, %p83
      %p85 = scmp.ne.s32.totalorder %s74, %s75
      %p86 = scmp.eq.s32.totalorder %s17, 0
      %p87 = por %p85, %p86
      %p88 = scmp.ne.s32.totalorder %s74, %s75
      %p89 = scmp.eq.s32.totalorder %s18, 1
      %p90 = por %p88, %p89
      %p92 = scmp.ne.s32.totalorder %s75, %s91
      %p93 = scmp.eq.s32.totalorder %s18, 0
      %p94 = por %p92, %p93
      %s95 = ssub.s32 %s20, %s34
      %p96 = scmp.eq.s32.totalorder %s95, 0
      %s98 = sadd.s32 %s97, 1
      %s99 = scalar_select %p96, %s97, %s98
      %p102 = pneg %p96
      %p103 = scmp.eq.s32.totalorder %s12, 1
      %p104 = por %p102, %p103
      %p105 = scmp.ne.s32.totalorder %s97, %s100
      %p106 = scmp.eq.s32.totalorder %s12, 0
      %p107 = por %p105, %p106
      %p108 = scmp.ne.s32.totalorder %s97, %s100
      %p109 = scmp.eq.s32.totalorder %s17, 1
      %p110 = por %p108, %p109
      %p111 = scmp.ne.s32.totalorder %s100, %s101
      %p112 = scmp.eq.s32.totalorder %s17, 0
      %p113 = por %p111, %p112
      %p114 = scmp.ne.s32.totalorder %s100, %s101
      %p115 = scmp.eq.s32.totalorder %s18, 1
      %p116 = por %p114, %p115
      %p118 = scmp.ne.s32.totalorder %s101, %s117
      %p119 = scmp.eq.s32.totalorder %s18, 0
      %p120 = por %p118, %p119
      %s121 = ssub.s32 %s19, %s38
      %s122 = ssub.s32 %s20, %s34
      %s123 = sor.u32 %s121, %s122
      %p124 = scmp.eq.s32.totalorder %s123, 0
      %s126 = sadd.s32 %s125, 1
      %s127 = scalar_select %p124, %s125, %s126
      %p130 = pneg %p124
      %p131 = scmp.eq.s32.totalorder %s12, 1
      %p132 = por %p130, %p131
      %p133 = scmp.ne.s32.totalorder %s125, %s128
      %p134 = scmp.eq.s32.totalorder %s12, 0
      %p135 = por %p133, %p134
      %p136 = scmp.ne.s32.totalorder %s125, %s128
      %p137 = scmp.eq.s32.totalorder %s17, 1
      %p138 = por %p136, %p137
      %p139 = scmp.ne.s32.totalorder %s128, %s129
      %p140 = scmp.eq.s32.totalorder %s17, 0
      %p141 = por %p139, %p140
      %p142 = scmp.ne.s32.totalorder %s128, %s129
      %p143 = scmp.eq.s32.totalorder %s18, 1
      %p144 = por %p142, %p143
      %p146 = scmp.ne.s32.totalorder %s129, %s145
      %p147 = scmp.eq.s32.totalorder %s18, 0
      %p148 = por %p146, %p147
      %p149 = scmp.le.s32.totalorder 1, %s12
      %p150 = scmp.lt.s32.totalorder %s12, 3
      %p151 = pnand %p149, %p150
      %p152 = pneg %p151
      // Predicated region
      $region9: #{tpu_custom_call.1} parent=5 // pred_check
        _
      $region10: #{tpu_custom_call.1} parent=5 // pred_check_branch
        %154 = sbr.rel (%p151) target = $region12
      $region11: #{tpu_custom_call.1} parent=5 // pred_region
        %s155 = ssub.s32 %s12, 1
        // Predicated region
        $region13: #{tpu_custom_call.1} parent=11 // pred_check
          %p156 = pneg %p87
        $region14: #{tpu_custom_call.1} parent=11 // pred_check_branch
          %158 = sbr.rel (%p156) target = $region16
        $region15: #{tpu_custom_call.1} parent=11 // pred_region
          %s159 = smul.u32 5, %s24
          %p160 = scmp.lt.s32.totalorder %s159, 4
          %s161 = scalar_select %p160, %s159, 4
          %p162 = scmp.lt.s32.totalorder %s23, 0
          %s163 = scalar_select %p162, %s23, 0
          %s164 = sadd.s32 %s163, %s161
          %s165 = smul.addr %s164, 4
          %s166 = scalar_lea.vmem %s1, %s165
          %s167 = smul.u32 5, %s24
        $region16: #{tpu_custom_call.1} parent=11 // pred_fallthru
          _
        // Predicated region
        $region17: #{tpu_custom_call.1} parent=11 // pred_check
          %p168 = pneg %p113
        $region18: #{tpu_custom_call.1} parent=11 // pred_check_branch
          %170 = sbr.rel (%p168) target = $region20
        $region19: #{tpu_custom_call.1} parent=11 // pred_region
          %p171 = scmp.lt.s32.totalorder %s23, 0
          %s172 = scalar_select %p171, %s23, 0
          %s173 = scalar_lea.vmem %s2, %s172
        $region20: #{tpu_custom_call.1} parent=11 // pred_fallthru
          _
      $region12: #{tpu_custom_call.1} parent=5 // pred_fallthru
        _
      %p174 = scmp.lt.s32.totalorder %s12, 2
      // Predicated region
      $region21: #{tpu_custom_call.1} parent=5 // pred_check
        %p175 = pneg %p174
      $region22: #{tpu_custom_call.1} parent=5 // pred_check_branch
        %177 = sbr.rel (%p175) target = $region24
      $region23: #{tpu_custom_call.1} parent=5 // pred_region
        // Predicated region
        $region25: #{tpu_custom_call.1} parent=23 // pred_check
          %p178 = pneg %p53
        $region26: #{tpu_custom_call.1} parent=23 // pred_check_branch
          %180 = sbr.rel (%p178) target = $region28
        $region27: #{tpu_custom_call.1} parent=23 // pred_region
          %s181 = smul.u32 32, %s19
          %p182 = scmp.lt.s32.totalorder %s181, 63
          %s183 = scalar_select %p182, %s181, 63
          %p184 = scmp.lt.s32.totalorder %s21, 0
          %s185 = scalar_select %p184, %s21, 0
          %s186 = sadd.s32 %s185, %s183
          %s187 = smul.addr %s186, 4
          %s188 = scalar_lea.vmem %s0, %s187
          %s189 = smul.u32 32, %s19
        $region28: #{tpu_custom_call.1} parent=23 // pred_fallthru
          _
      $region24: #{tpu_custom_call.1} parent=5 // pred_fallthru
        _
      %p190 = scmp.le.s32.totalorder 1, %s12
      %p191 = scmp.lt.s32.totalorder %s12, 3
      %p192 = pnand %p190, %p191
      %p193 = pneg %p192
      // Predicated region
      $region29: #{tpu_custom_call.1} parent=5 // pred_check
        _
      $region30: #{tpu_custom_call.1} parent=5 // pred_check_branch
        %195 = sbr.rel (%p192) target = $region32
      $region31: #{tpu_custom_call.1} parent=5 // pred_region
        %s196 = ssub.s32 %s12, 1
        %s197 = smul.u32 32, %s22
        %p198 = scmp.lt.s32.totalorder %s197, 63
        %s199 = scalar_select %p198, %s197, 63
        %p200 = scmp.lt.s32.totalorder %s24, 0
        %s201 = scalar_select %p200, %s24, 0
        %s202 = sadd.s32 %s201, %s199
        %s203 = smul.addr %s202, 4
        %s204 = scalar_lea.vmem %s0, %s203
        %p205 = pneg %p59
        %p206 = pneg %p56
        %s207 = smul.u32 5, %s24
        %p208 = scmp.lt.s32.totalorder %s207, 4
        %s209 = scalar_select %p208, %s207, 4
        %p210 = scmp.lt.s32.totalorder %s23, 0
        %s211 = scalar_select %p210, %s23, 0
        %s212 = sadd.s32 %s211, %s209
        %s213 = smul.addr %s212, 4
        %s214 = scalar_lea.vmem %s1, %s213
        %p215 = pneg %p87
        %p216 = pneg %p84
        %p217 = scmp.lt.s32.totalorder %s23, 0
        %s218 = scalar_select %p217, %s23, 0
        %s219 = scalar_lea.vmem %s2, %s218
        %p220 = pneg %p113
        %p221 = pneg %p110
        %p222 = pneg %p141
        %p223 = pneg %p138
        %s224 = sand.u32 %s128, 1
        %s225 = scalar_lea.sflag [#allocation4], %s224
        %s226 = sand.u32 %s128, 1
        %s227 = smul.addr %s226, 256
        %s228 = scalar_lea.vmem [#allocation3], %s227
        %s229 = smul.u32 32, %s22
        %p230 = scmp.lt.s32.totalorder %s229, 63
        %s231 = scalar_select %p230, %s229, 63
        %p232 = scmp.lt.s32.totalorder %s24, 0
        %s233 = scalar_select %p232, %s24, 0
        %s234 = sadd.s32 %s233, %s231
        %s235 = smul.addr %s234, 4
        %s236 = scalar_lea.vmem %s0, %s235
        %s237 = smul.u32 32, %s22
        %s238 = smul.u32 5, %s24
        %p239 = scmp.lt.s32.totalorder %s238, 4
        %s240 = scalar_select %p239, %s238, 4
        %p241 = scmp.lt.s32.totalorder %s23, 0
        %s242 = scalar_select %p241, %s23, 0
        %s243 = sadd.s32 %s242, %s240
        %s244 = smul.addr %s243, 4
        %s245 = scalar_lea.vmem %s1, %s244
        %s246 = smul.u32 5, %s24
        %p247 = scmp.lt.s32.totalorder %s23, 0
        %s248 = scalar_select %p247, %s23, 0
        %s249 = scalar_lea.vmem %s2, %s248
        %s250 = smul.u32 32, %s22
        %p252 = scmp.eq.s32.totalorder %s24, 0
        // Predicated region
        $region33: #{tpu_custom_call.1} parent=31 // pred_check
          %p253 = pneg %p252
        $region34: #{tpu_custom_call.1} parent=31 // pred_check_branch
          %255 = sbr.rel (%p253) target = $region36
        $region35: #{tpu_custom_call.1} parent=31 // pred_region
          %256 = vst [vmem:[#allocation2] sm:$0xff] 0.0
          %257 = vst [vmem:[#allocation2 + $0x8] sm:$0xff] 0.0
          %258 = vst [vmem:[#allocation2 + $0x10] sm:$0xff] 0.0
          %259 = vst [vmem:[#allocation2 + $0x18] sm:$0xff] 0.0
          %260 = vst [vmem:[#allocation2 + $0x20] sm:$0xff] 0.0
          %261 = vst [vmem:[#allocation2 + $0x28] sm:$0xff] 0.0
          %262 = vst [vmem:[#allocation2 + $0x30] sm:$0xff] 0.0
          %263 = vst [vmem:[#allocation2 + $0x38] sm:$0xff] 0.0
          %264 = vst [vmem:[#allocation2 + $0x40] sm:$0xff] 0.0
          %265 = vst [vmem:[#allocation2 + $0x48] sm:$0xff] 0.0
          %266 = vst [vmem:[#allocation2 + $0x50] sm:$0xff] 0.0
          %267 = vst [vmem:[#allocation2 + $0x58] sm:$0xff] 0.0
          %268 = vst [vmem:[#allocation2 + $0x60] sm:$0xff] 0.0
          %269 = vst [vmem:[#allocation2 + $0x68] sm:$0xff] 0.0
          %270 = vst [vmem:[#allocation2 + $0x70] sm:$0xff] 0.0
          %271 = vst [vmem:[#allocation2 + $0x78] sm:$0xff] 0.0
          %272 = vst [vmem:[#allocation2 + $0x80] sm:$0xff] 0.0
          %273 = vst [vmem:[#allocation2 + $0x88] sm:$0xff] 0.0
          %274 = vst [vmem:[#allocation2 + $0x90] sm:$0xff] 0.0
          %275 = vst [vmem:[#allocation2 + $0x98] sm:$0xff] 0.0
          %276 = vst [vmem:[#allocation2 + $0xa0] sm:$0xff] 0.0
          %277 = vst [vmem:[#allocation2 + $0xa8] sm:$0xff] 0.0
          %278 = vst [vmem:[#allocation2 + $0xb0] sm:$0xff] 0.0
          %279 = vst [vmem:[#allocation2 + $0xb8] sm:$0xff] 0.0
          %280 = vst [vmem:[#allocation2 + $0xc0] sm:$0xff] 0.0
          %281 = vst [vmem:[#allocation2 + $0xc8] sm:$0xff] 0.0
          %282 = vst [vmem:[#allocation2 + $0xd0] sm:$0xff] 0.0
          %283 = vst [vmem:[#allocation2 + $0xd8] sm:$0xff] 0.0
          %284 = vst [vmem:[#allocation2 + $0xe0] sm:$0xff] 0.0
          %285 = vst [vmem:[#allocation2 + $0xe8] sm:$0xff] 0.0
          %286 = vst [vmem:[#allocation2 + $0xf0] sm:$0xff] 0.0
          %287 = vst [vmem:[#allocation2 + $0xf8] sm:$0xff] 0.0
        $region36: #{tpu_custom_call.1} parent=31 // pred_fallthru
          _
        %v288 = vld [vmem:[#allocation2] sm:$0xff]
        %v289 = vld [vmem:[#allocation2 + $0x8] sm:$0xff]
        %v290 = vld [vmem:[#allocation2 + $0x10] sm:$0xff]
        %v291 = vld [vmem:[#allocation2 + $0x18] sm:$0xff]
        %v292 = vld [vmem:[#allocation2 + $0x20] sm:$0xff]
        %v293 = vld [vmem:[#allocation2 + $0x28] sm:$0xff]
        %v294 = vld [vmem:[#allocation2 + $0x30] sm:$0xff]
        %v295 = vld [vmem:[#allocation2 + $0x38] sm:$0xff]
        %v296 = vld [vmem:[#allocation2 + $0x40] sm:$0xff]
        %v297 = vld [vmem:[#allocation2 + $0x48] sm:$0xff]
        %v298 = vld [vmem:[#allocation2 + $0x50] sm:$0xff]
        %v299 = vld [vmem:[#allocation2 + $0x58] sm:$0xff]
        %v300 = vld [vmem:[#allocation2 + $0x60] sm:$0xff]
        %v301 = vld [vmem:[#allocation2 + $0x68] sm:$0xff]
        %v302 = vld [vmem:[#allocation2 + $0x70] sm:$0xff]
        %v303 = vld [vmem:[#allocation2 + $0x78] sm:$0xff]
        %v304 = vld [vmem:[#allocation2 + $0x80] sm:$0xff]
        %v305 = vld [vmem:[#allocation2 + $0x88] sm:$0xff]
        %v306 = vld [vmem:[#allocation2 + $0x90] sm:$0xff]
        %v307 = vld [vmem:[#allocation2 + $0x98] sm:$0xff]
        %v308 = vld [vmem:[#allocation2 + $0xa0] sm:$0xff]
        %v309 = vld [vmem:[#allocation2 + $0xa8] sm:$0xff]
        %v310 = vld [vmem:[#allocation2 + $0xb0] sm:$0xff]
        %v311 = vld [vmem:[#allocation2 + $0xb8] sm:$0xff]
        %v312 = vld [vmem:[#allocation2 + $0xc0] sm:$0xff]
        %v313 = vld [vmem:[#allocation2 + $0xc8] sm:$0xff]
        %v314 = vld [vmem:[#allocation2 + $0xd0] sm:$0xff]
        %v315 = vld [vmem:[#allocation2 + $0xd8] sm:$0xff]
        %v316 = vld [vmem:[#allocation2 + $0xe0] sm:$0xff]
        %v317 = vld [vmem:[#allocation2 + $0xe8] sm:$0xff]
        %v318 = vld [vmem:[#allocation2 + $0xf0] sm:$0xff]
        %v319 = vld [vmem:[#allocation2 + $0xf8] sm:$0xff]
        %v320 = vld [vmem:[%s236] sm:$0xf]
        %v321 = vld [vmem:[%s236 + $0x4] sm:$0xf]
        %v322 = vld [vmem:[%s236 + $0x8] sm:$0xf]
        %v323 = vld [vmem:[%s236 + $0xc] sm:$0xf]
        %v324 = vld [vmem:[%s236 + $0x10] sm:$0xf]
        %v325 = vld [vmem:[%s236 + $0x14] sm:$0xf]
        %v326 = vld [vmem:[%s236 + $0x18] sm:$0xf]
        %v327 = vld [vmem:[%s236 + $0x1c] sm:$0xf]
        %v328 = vld [vmem:[%s236 + $0x20] sm:$0xf]
        %v329 = vld [vmem:[%s236 + $0x24] sm:$0xf]
        %v330 = vld [vmem:[%s236 + $0x28] sm:$0xf]
        %v331 = vld [vmem:[%s236 + $0x2c] sm:$0xf]
        %v332 = vld [vmem:[%s236 + $0x30] sm:$0xf]
        %v333 = vld [vmem:[%s236 + $0x34] sm:$0xf]
        %v334 = vld [vmem:[%s236 + $0x38] sm:$0xf]
        %v335 = vld [vmem:[%s236 + $0x3c] sm:$0xf]
        %v336 = vld [vmem:[%s236 + $0x40] sm:$0xf]
        %v337 = vld [vmem:[%s236 + $0x44] sm:$0xf]
        %v338 = vld [vmem:[%s236 + $0x48] sm:$0xf]
        %v339 = vld [vmem:[%s236 + $0x4c] sm:$0xf]
        %v340 = vld [vmem:[%s236 + $0x50] sm:$0xf]
        %v341 = vld [vmem:[%s236 + $0x54] sm:$0xf]
        %v342 = vld [vmem:[%s236 + $0x58] sm:$0xf]
        %v343 = vld [vmem:[%s236 + $0x5c] sm:$0xf]
        %v344 = vld [vmem:[%s236 + $0x60] sm:$0xf]
        %v345 = vld [vmem:[%s236 + $0x64] sm:$0xf]
        %v346 = vld [vmem:[%s236 + $0x68] sm:$0xf]
        %v347 = vld [vmem:[%s236 + $0x6c] sm:$0xf]
        %v348 = vld [vmem:[%s236 + $0x70] sm:$0xf]
        %v349 = vld [vmem:[%s236 + $0x74] sm:$0xf]
        %v350 = vld [vmem:[%s236 + $0x78] sm:$0xf]
        %v351 = vld [vmem:[%s236 + $0x7c] sm:$0xf]
        %v352 = vld [vmem:[%s245] sm:$0xf]
        %v353 = vld [vmem:[%s245 + $0x4] sm:$0xf]
        %v354 = vld [vmem:[%s245 + $0x8] sm:$0xf]
        %v355 = vld [vmem:[%s245 + $0xc] sm:$0xf]
        %v356 = vld [vmem:[%s245 + $0x10] sm:$0x3]
        %v389 = vunpack.c.l.b16 %v320
        %v390 = vunpack.c.l.b16 %v321
        %v391 = vunpack.c.l.b16 %v322
        %v392 = vunpack.c.l.b16 %v323
        %v393 = vunpack.c.l.b16 %v324
        %v394 = vunpack.c.l.b16 %v325
        %v395 = vunpack.c.l.b16 %v326
        %v396 = vunpack.c.l.b16 %v327
        %v397 = vunpack.c.l.b16 %v328
        %v398 = vunpack.c.l.b16 %v329
        %v399 = vunpack.c.l.b16 %v330
        %v400 = vunpack.c.l.b16 %v331
        %v401 = vunpack.c.l.b16 %v332
        %v402 = vunpack.c.l.b16 %v333
        %v403 = vunpack.c.l.b16 %v334
        %v404 = vunpack.c.l.b16 %v335
        %v405 = vunpack.c.l.b16 %v336
        %v406 = vunpack.c.l.b16 %v337
        %v407 = vunpack.c.l.b16 %v338
        %v408 = vunpack.c.l.b16 %v339
        %v409 = vunpack.c.l.b16 %v340
        %v410 = vunpack.c.l.b16 %v341
        %v411 = vunpack.c.l.b16 %v342
        %v412 = vunpack.c.l.b16 %v343
        %v413 = vunpack.c.l.b16 %v344
        %v414 = vunpack.c.l.b16 %v345
        %v415 = vunpack.c.l.b16 %v346
        %v416 = vunpack.c.l.b16 %v347
        %v417 = vunpack.c.l.b16 %v348
        %v418 = vunpack.c.l.b16 %v349
        %v419 = vunpack.c.l.b16 %v350
        %v420 = vunpack.c.l.b16 %v351
        %v421 = vpack.c.b16 %v390, %v389
        %v422 = vpack.c.b16 %v392, %v391
        %v423 = vpack.c.b16 %v394, %v393
        %v424 = vpack.c.b16 %v396, %v395
        %v425 = vpack.c.b16 %v398, %v397
        %v426 = vpack.c.b16 %v400, %v399
        %v427 = vpack.c.b16 %v402, %v401
        %v428 = vpack.c.b16 %v404, %v403
        %v429 = vpack.c.b16 %v406, %v405
        %v430 = vpack.c.b16 %v408, %v407
        %v431 = vpack.c.b16 %v410, %v409
        %v432 = vpack.c.b16 %v412, %v411
        %v433 = vpack.c.b16 %v414, %v413
        %v434 = vpack.c.b16 %v416, %v415
        %v435 = vpack.c.b16 %v418, %v417
        %v436 = vpack.c.b16 %v420, %v419
        %v442 = vunpack.c.l.b16 %v352
        %v443 = vunpack.c.l.b16 %v353
        %v444 = vunpack.c.l.b16 %v354
        %v445 = vunpack.c.l.b16 %v355
        %v446 = vunpack.c.l.b16 %v356
        %v447 = vpack.c.b16 %v443, %v442
        %v448 = vpack.c.b16 %v445, %v444
        %v449 = vpack.c.b16 %v446, %v446
        %vm452 = vcmask 293888
        %v454 = vsel %vm452, %v421, 0
        %v457 = vsel %vm452, %v422, 0
        %v460 = vsel %vm452, %v423, 0
        %v463 = vsel %vm452, %v424, 0
        %v466 = vsel %vm452, %v425, 0
        %v469 = vsel %vm452, %v426, 0
        %v472 = vsel %vm452, %v427, 0
        %v475 = vsel %vm452, %v428, 0
        %v478 = vsel %vm452, %v429, 0
        %v481 = vsel %vm452, %v430, 0
        %v484 = vsel %vm452, %v431, 0
        %v487 = vsel %vm452, %v432, 0
        %v490 = vsel %vm452, %v433, 0
        %v493 = vsel %vm452, %v434, 0
        %v496 = vsel %vm452, %v435, 0
        %v499 = vsel %vm452, %v436, 0
        %vm501 = vcmask 1041408
        %v503 = vsel %vm501, %v449, 0
        %505 = vmatprep.subr.bf16.mxu0 0
        %506 = vmatpush1.bf16.msra.mxu0 %v447
        %507 = vmatprep.subr.bf16.mxu0 0
        %508 = vmatpush1.bf16.msra.mxu0 %v448
        %509 = vmatprep.subr.bf16.mxu0 0
        %510 = vmatpush1.bf16.msra.mxu0 %v503
        %511 = vmatprep.subr.bf16.mxu0 0
        %512 = vmatpush1.bf16.msra.mxu0 0
        %513 = vmatprep.subr.bf16.mxu0 0
        %514 = vmatpush1.bf16.msra.mxu0 0
        %515 = vmatprep.subr.bf16.mxu0 0
        %516 = vmatpush1.bf16.msra.mxu0 0
        %517 = vmatprep.subr.bf16.mxu0 0
        %518 = vmatpush1.bf16.msra.mxu0 0
        %519 = vmatprep.subr.bf16.mxu0 0
        %520 = vmatpush1.bf16.msra.mxu0 0
        %521 = vmatprep.subr.bf16.mxu0 0
        %522 = vmatpush1.bf16.msra.mxu0 0
        %523 = vmatprep.subr.bf16.mxu0 0
        %524 = vmatpush1.bf16.msra.mxu0 0
        %525 = vmatprep.subr.bf16.mxu0 0
        %526 = vmatpush1.bf16.msra.mxu0 0
        %527 = vmatprep.subr.bf16.mxu0 0
        %528 = vmatpush1.bf16.msra.mxu0 0
        %529 = vmatprep.subr.bf16.mxu0 0
        %530 = vmatpush1.bf16.msra.mxu0 0
        %531 = vmatprep.subr.bf16.mxu0 0
        %532 = vmatpush1.bf16.msra.mxu0 0
        %533 = vmatprep.subr.bf16.mxu0 0
        %534 = vmatpush1.bf16.msra.mxu0 0
        %535 = vmatprep.subr.bf16.mxu0 0
        %536 = vmatpush1.bf16.msra.mxu0 0
        %537 = vmatprep.mubr.bf16.mxu0 0
        %538 = vmatmul.mubr.bf16.gmra.mrb[0].mxu0 %v454
        %v539 = vpop.f32.mrb[0].mxu0
        %v540 = vadd.f32 0.0, %v539
        %v541 = vpop.f32.mrb[0].mxu0
        %v542 = vpop.f32.mrb[0].mxu0
        %v543 = vadd.f32 0.0, %v542
        %v544 = vpop.f32.mrb[0].mxu0
        %545 = vmatprep.mubr.bf16.mxu0 0
        %546 = vmatmul.mubr.bf16.gmra.mrb[0].mxu0 %v457
        %v547 = vpop.f32.mrb[0].mxu0
        %v548 = vadd.f32 0.0, %v547
        %v549 = vpop.f32.mrb[0].mxu0
        %v550 = vpop.f32.mrb[0].mxu0
        %v551 = vadd.f32 0.0, %v550
        %v552 = vpop.f32.mrb[0].mxu0
        %553 = vmatprep.mubr.bf16.mxu0 0
        %554 = vmatmul.mubr.bf16.gmra.mrb[0].mxu0 %v460
        %v555 = vpop.f32.mrb[0].mxu0
        %v556 = vadd.f32 0.0, %v555
        %v557 = vpop.f32.mrb[0].mxu0
        %v558 = vpop.f32.mrb[0].mxu0
        %v559 = vadd.f32 0.0, %v558
        %v560 = vpop.f32.mrb[0].mxu0
        %561 = vmatprep.mubr.bf16.mxu0 0
        %562 = vmatmul.mubr.bf16.gmra.mrb[0].mxu0 %v463
        %v563 = vpop.f32.mrb[0].mxu0
        %v564 = vadd.f32 0.0, %v563
        %v565 = vpop.f32.mrb[0].mxu0
        %v566 = vpop.f32.mrb[0].mxu0
        %v567 = vadd.f32 0.0, %v566
        %v568 = vpop.f32.mrb[0].mxu0
        %569 = vmatprep.mubr.bf16.mxu0 0
        %570 = vmatmul.mubr.bf16.gmra.mrb[0].mxu0 %v466
        %v571 = vpop.f32.mrb[0].mxu0
        %v572 = vadd.f32 0.0, %v571
        %v573 = vpop.f32.mrb[0].mxu0
        %v574 = vpop.f32.mrb[0].mxu0
        %v575 = vadd.f32 0.0, %v574
        %v576 = vpop.f32.mrb[0].mxu0
        %577 = vmatprep.mubr.bf16.mxu0 0
        %578 = vmatmul.mubr.bf16.gmra.mrb[0].mxu0 %v469
        %v579 = vpop.f32.mrb[0].mxu0
        %v580 = vadd.f32 0.0, %v579
        %v581 = vpop.f32.mrb[0].mxu0
        %v582 = vpop.f32.mrb[0].mxu0
        %v583 = vadd.f32 0.0, %v582
        %v584 = vpop.f32.mrb[0].mxu0
        %585 = vmatprep.mubr.bf16.mxu0 0
        %586 = vmatmul.mubr.bf16.gmra.mrb[0].mxu0 %v472
        %v587 = vpop.f32.mrb[0].mxu0
        %v588 = vadd.f32 0.0, %v587
        %v589 = vpop.f32.mrb[0].mxu0
        %v590 = vpop.f32.mrb[0].mxu0
        %v591 = vadd.f32 0.0, %v590
        %v592 = vpop.f32.mrb[0].mxu0
        %593 = vmatprep.mubr.bf16.mxu0 0
        %594 = vmatmul.mubr.bf16.gmra.mrb[0].mxu0 %v475
        %v595 = vpop.f32.mrb[0].mxu0
        %v596 = vadd.f32 0.0, %v595
        %v597 = vpop.f32.mrb[0].mxu0
        %v598 = vpop.f32.mrb[0].mxu0
        %v599 = vadd.f32 0.0, %v598
        %v600 = vpop.f32.mrb[0].mxu0
        %601 = vmatprep.mubr.bf16.mxu0 0
        %602 = vmatmul.mubr.bf16.gmra.mrb[0].mxu0 %v478
        %v603 = vpop.f32.mrb[0].mxu0
        %v604 = vadd.f32 0.0, %v603
        %v605 = vpop.f32.mrb[0].mxu0
        %v606 = vpop.f32.mrb[0].mxu0
        %v607 = vadd.f32 0.0, %v606
        %v608 = vpop.f32.mrb[0].mxu0
        %609 = vmatprep.mubr.bf16.mxu0 0
        %610 = vmatmul.mubr.bf16.gmra.mrb[0].mxu0 %v481
        %v611 = vpop.f32.mrb[0].mxu0
        %v612 = vadd.f32 0.0, %v611
        %v613 = vpop.f32.mrb[0].mxu0
        %v614 = vpop.f32.mrb[0].mxu0
        %v615 = vadd.f32 0.0, %v614
        %v616 = vpop.f32.mrb[0].mxu0
        %617 = vmatprep.mubr.bf16.mxu0 0
        %618 = vmatmul.mubr.bf16.gmra.mrb[0].mxu0 %v484
        %v619 = vpop.f32.mrb[0].mxu0
        %v620 = vadd.f32 0.0, %v619
        %v621 = vpop.f32.mrb[0].mxu0
        %v622 = vpop.f32.mrb[0].mxu0
        %v623 = vadd.f32 0.0, %v622
        %v624 = vpop.f32.mrb[0].mxu0
        %625 = vmatprep.mubr.bf16.mxu0 0
        %626 = vmatmul.mubr.bf16.gmra.mrb[0].mxu0 %v487
        %v627 = vpop.f32.mrb[0].mxu0
        %v628 = vadd.f32 0.0, %v627
        %v629 = vpop.f32.mrb[0].mxu0
        %v630 = vpop.f32.mrb[0].mxu0
        %v631 = vadd.f32 0.0, %v630
        %v632 = vpop.f32.mrb[0].mxu0
        %633 = vmatprep.mubr.bf16.mxu0 0
        %634 = vmatmul.mubr.bf16.gmra.mrb[0].mxu0 %v490
        %v635 = vpop.f32.mrb[0].mxu0
        %v636 = vadd.f32 0.0, %v635
        %v637 = vpop.f32.mrb[0].mxu0
        %v638 = vpop.f32.mrb[0].mxu0
        %v639 = vadd.f32 0.0, %v638
        %v640 = vpop.f32.mrb[0].mxu0
        %641 = vmatprep.mubr.bf16.mxu0 0
        %642 = vmatmul.mubr.bf16.gmra.mrb[0].mxu0 %v493
        %v643 = vpop.f32.mrb[0].mxu0
        %v644 = vadd.f32 0.0, %v643
        %v645 = vpop.f32.mrb[0].mxu0
        %v646 = vpop.f32.mrb[0].mxu0
        %v647 = vadd.f32 0.0, %v646
        %v648 = vpop.f32.mrb[0].mxu0
        %649 = vmatprep.mubr.bf16.mxu0 0
        %650 = vmatmul.mubr.bf16.gmra.mrb[0].mxu0 %v496
        %v651 = vpop.f32.mrb[0].mxu0
        %v652 = vadd.f32 0.0, %v651
        %v653 = vpop.f32.mrb[0].mxu0
        %v654 = vpop.f32.mrb[0].mxu0
        %v655 = vadd.f32 0.0, %v654
        %v656 = vpop.f32.mrb[0].mxu0
        %657 = vmatprep.mubr.bf16.mxu0 0
        %658 = vmatmul.mubr.bf16.gmra.mrb[0].mxu0 %v499
        %v659 = vpop.f32.mrb[0].mxu0
        %v660 = vadd.f32 0.0, %v659
        %v661 = vpop.f32.mrb[0].mxu0
        %v662 = vpop.f32.mrb[0].mxu0
        %v663 = vadd.f32 0.0, %v662
        %v664 = vpop.f32.mrb[0].mxu0
        %665 = vdwg.mxu0
        %v666 = vadd.f32 %v288, %v540
        %v667 = vadd.f32 %v289, %v543
        %v668 = vadd.f32 %v290, %v548
        %v669 = vadd.f32 %v291, %v551
        %v670 = vadd.f32 %v292, %v556
        %v671 = vadd.f32 %v293, %v559
        %v672 = vadd.f32 %v294, %v564
        %v673 = vadd.f32 %v295, %v567
        %v674 = vadd.f32 %v296, %v572
        %v675 = vadd.f32 %v297, %v575
        %v676 = vadd.f32 %v298, %v580
        %v677 = vadd.f32 %v299, %v583
        %v678 = vadd.f32 %v300, %v588
        %v679 = vadd.f32 %v301, %v591
        %v680 = vadd.f32 %v302, %v596
        %v681 = vadd.f32 %v303, %v599
        %v682 = vadd.f32 %v304, %v604
        %v683 = vadd.f32 %v305, %v607
        %v684 = vadd.f32 %v306, %v612
        %v685 = vadd.f32 %v307, %v615
        %v686 = vadd.f32 %v308, %v620
        %v687 = vadd.f32 %v309, %v623
        %v688 = vadd.f32 %v310, %v628
        %v689 = vadd.f32 %v311, %v631
        %v690 = vadd.f32 %v312, %v636
        %v691 = vadd.f32 %v313, %v639
        %v692 = vadd.f32 %v314, %v644
        %v693 = vadd.f32 %v315, %v647
        %v694 = vadd.f32 %v316, %v652
        %v695 = vadd.f32 %v317, %v655
        %v696 = vadd.f32 %v318, %v660
        %v697 = vadd.f32 %v319, %v663
        %698 = vst [vmem:[#allocation2] sm:$0xff] %v666
        %699 = vst [vmem:[#allocation2 + $0x8] sm:$0xff] %v667
        %700 = vst [vmem:[#allocation2 + $0x10] sm:$0xff] %v668
        %701 = vst [vmem:[#allocation2 + $0x18] sm:$0xff] %v669
        %702 = vst [vmem:[#allocation2 + $0x20] sm:$0xff] %v670
        %703 = vst [vmem:[#allocation2 + $0x28] sm:$0xff] %v671
        %704 = vst [vmem:[#allocation2 + $0x30] sm:$0xff] %v672
        %705 = vst [vmem:[#allocation2 + $0x38] sm:$0xff] %v673
        %706 = vst [vmem:[#allocation2 + $0x40] sm:$0xff] %v674
        %707 = vst [vmem:[#allocation2 + $0x48] sm:$0xff] %v675
        %708 = vst [vmem:[#allocation2 + $0x50] sm:$0xff] %v676
        %709 = vst [vmem:[#allocation2 + $0x58] sm:$0xff] %v677
        %710 = vst [vmem:[#allocation2 + $0x60] sm:$0xff] %v678
        %711 = vst [vmem:[#allocation2 + $0x68] sm:$0xff] %v679
        %712 = vst [vmem:[#allocation2 + $0x70] sm:$0xff] %v680
        %713 = vst [vmem:[#allocation2 + $0x78] sm:$0xff] %v681
        %714 = vst [vmem:[#allocation2 + $0x80] sm:$0xff] %v682
        %715 = vst [vmem:[#allocation2 + $0x88] sm:$0xff] %v683
        %716 = vst [vmem:[#allocation2 + $0x90] sm:$0xff] %v684
        %717 = vst [vmem:[#allocation2 + $0x98] sm:$0xff] %v685
        %718 = vst [vmem:[#allocation2 + $0xa0] sm:$0xff] %v686
        %719 = vst [vmem:[#allocation2 + $0xa8] sm:$0xff] %v687
        %720 = vst [vmem:[#allocation2 + $0xb0] sm:$0xff] %v688
        %721 = vst [vmem:[#allocation2 + $0xb8] sm:$0xff] %v689
        %722 = vst [vmem:[#allocation2 + $0xc0] sm:$0xff] %v690
        %723 = vst [vmem:[#allocation2 + $0xc8] sm:$0xff] %v691
        %724 = vst [vmem:[#allocation2 + $0xd0] sm:$0xff] %v692
        %725 = vst [vmem:[#allocation2 + $0xd8] sm:$0xff] %v693
        %726 = vst [vmem:[#allocation2 + $0xe0] sm:$0xff] %v694
        %727 = vst [vmem:[#allocation2 + $0xe8] sm:$0xff] %v695
        %728 = vst [vmem:[#allocation2 + $0xf0] sm:$0xff] %v696
        %729 = vst [vmem:[#allocation2 + $0xf8] sm:$0xff] %v697
        // Predicated region
        $region37: #{tpu_custom_call.1} parent=31 // pred_check
          %p730 = pneg %p252
        $region38: #{tpu_custom_call.1} parent=31 // pred_check_branch
          %732 = sbr.rel (%p730) target = $region40
        $region39: #{tpu_custom_call.1} parent=31 // pred_region
          %v733 = vld [vmem:[#allocation2] sm:$0xff]
          %v734 = vld [vmem:[#allocation2 + $0x8] sm:$0xff]
          %v735 = vld [vmem:[#allocation2 + $0x10] sm:$0xff]
          %v736 = vld [vmem:[#allocation2 + $0x18] sm:$0xff]
          %v737 = vld [vmem:[#allocation2 + $0x20] sm:$0xff]
          %v738 = vld [vmem:[#allocation2 + $0x28] sm:$0xff]
          %v739 = vld [vmem:[#allocation2 + $0x30] sm:$0xff]
          %v740 = vld [vmem:[#allocation2 + $0x38] sm:$0xff]
          %v741 = vld [vmem:[#allocation2 + $0x40] sm:$0xff]
          %v742 = vld [vmem:[#allocation2 + $0x48] sm:$0xff]
          %v743 = vld [vmem:[#allocation2 + $0x50] sm:$0xff]
          %v744 = vld [vmem:[#allocation2 + $0x58] sm:$0xff]
          %v745 = vld [vmem:[#allocation2 + $0x60] sm:$0xff]
          %v746 = vld [vmem:[#allocation2 + $0x68] sm:$0xff]
          %v747 = vld [vmem:[#allocation2 + $0x70] sm:$0xff]
          %v748 = vld [vmem:[#allocation2 + $0x78] sm:$0xff]
          %v749 = vld [vmem:[#allocation2 + $0x80] sm:$0xff]
          %v750 = vld [vmem:[#allocation2 + $0x88] sm:$0xff]
          %v751 = vld [vmem:[#allocation2 + $0x90] sm:$0xff]
          %v752 = vld [vmem:[#allocation2 + $0x98] sm:$0xff]
          %v753 = vld [vmem:[#allocation2 + $0xa0] sm:$0xff]
          %v754 = vld [vmem:[#allocation2 + $0xa8] sm:$0xff]
          %v755 = vld [vmem:[#allocation2 + $0xb0] sm:$0xff]
          %v756 = vld [vmem:[#allocation2 + $0xb8] sm:$0xff]
          %v757 = vld [vmem:[#allocation2 + $0xc0] sm:$0xff]
          %v758 = vld [vmem:[#allocation2 + $0xc8] sm:$0xff]
          %v759 = vld [vmem:[#allocation2 + $0xd0] sm:$0xff]
          %v760 = vld [vmem:[#allocation2 + $0xd8] sm:$0xff]
          %v761 = vld [vmem:[#allocation2 + $0xe0] sm:$0xff]
          %v762 = vld [vmem:[#allocation2 + $0xe8] sm:$0xff]
          %v763 = vld [vmem:[#allocation2 + $0xf0] sm:$0xff]
          %v764 = vld [vmem:[#allocation2 + $0xf8] sm:$0xff]
          %v765 = vld [vmem:[%s249] sm:$0x1]
          %v767 = vlaneseq
          %v768 = vshrl.u32 %v767, 7
          %v769 = vsub.s32 0, %v768
          %v770 = vrot.slane %v765, %v769
          %v772 = vadd.f32 %v733, %v770
          %v773 = vadd.f32 %v734, %v770
          %v774 = vadd.f32 %v735, %v770
          %v775 = vadd.f32 %v736, %v770
          %v776 = vadd.f32 %v737, %v770
          %v777 = vadd.f32 %v738, %v770
          %v778 = vadd.f32 %v739, %v770
          %v779 = vadd.f32 %v740, %v770
          %v780 = vadd.f32 %v741, %v770
          %v781 = vadd.f32 %v742, %v770
          %v782 = vadd.f32 %v743, %v770
          %v783 = vadd.f32 %v744, %v770
          %v784 = vadd.f32 %v745, %v770
          %v785 = vadd.f32 %v746, %v770
          %v786 = vadd.f32 %v747, %v770
          %v787 = vadd.f32 %v748, %v770
          %v788 = vadd.f32 %v749, %v770
          %v789 = vadd.f32 %v750, %v770
          %v790 = vadd.f32 %v751, %v770
          %v791 = vadd.f32 %v752, %v770
          %v792 = vadd.f32 %v753, %v770
          %v793 = vadd.f32 %v754, %v770
          %v794 = vadd.f32 %v755, %v770
          %v795 = vadd.f32 %v756, %v770
          %v796 = vadd.f32 %v757, %v770
          %v797 = vadd.f32 %v758, %v770
          %v798 = vadd.f32 %v759, %v770
          %v799 = vadd.f32 %v760, %v770
          %v800 = vadd.f32 %v761, %v770
          %v801 = vadd.f32 %v762, %v770
          %v802 = vadd.f32 %v763, %v770
          %v803 = vadd.f32 %v764, %v770
          %v804 = vadd.f32 %v772, 3.0
          %v805 = vadd.f32 %v773, 3.0
          %v806 = vadd.f32 %v774, 3.0
          %v807 = vadd.f32 %v775, 3.0
          %v808 = vadd.f32 %v776, 3.0
          %v809 = vadd.f32 %v777, 3.0
          %v810 = vadd.f32 %v778, 3.0
          %v811 = vadd.f32 %v779, 3.0
          %v812 = vadd.f32 %v780, 3.0
          %v813 = vadd.f32 %v781, 3.0
          %v814 = vadd.f32 %v782, 3.0
          %v815 = vadd.f32 %v783, 3.0
          %v816 = vadd.f32 %v784, 3.0
          %v817 = vadd.f32 %v785, 3.0
          %v818 = vadd.f32 %v786, 3.0
          %v819 = vadd.f32 %v787, 3.0
          %v820 = vadd.f32 %v788, 3.0
          %v821 = vadd.f32 %v789, 3.0
          %v822 = vadd.f32 %v790, 3.0
          %v823 = vadd.f32 %v791, 3.0
          %v824 = vadd.f32 %v792, 3.0
          %v825 = vadd.f32 %v793, 3.0
          %v826 = vadd.f32 %v794, 3.0
          %v827 = vadd.f32 %v795, 3.0
          %v828 = vadd.f32 %v796, 3.0
          %v829 = vadd.f32 %v797, 3.0
          %v830 = vadd.f32 %v798, 3.0
          %v831 = vadd.f32 %v799, 3.0
          %v832 = vadd.f32 %v800, 3.0
          %v833 = vadd.f32 %v801, 3.0
          %v834 = vadd.f32 %v802, 3.0
          %v835 = vadd.f32 %v803, 3.0
          %v836 = vmax.f32 %v804, 0.0
          %v837 = vmax.f32 %v805, 0.0
          %v838 = vmax.f32 %v806, 0.0
          %v839 = vmax.f32 %v807, 0.0
          %v840 = vmax.f32 %v808, 0.0
          %v841 = vmax.f32 %v809, 0.0
          %v842 = vmax.f32 %v810, 0.0
          %v843 = vmax.f32 %v811, 0.0
          %v844 = vmax.f32 %v812, 0.0
          %v845 = vmax.f32 %v813, 0.0
          %v846 = vmax.f32 %v814, 0.0
          %v847 = vmax.f32 %v815, 0.0
          %v848 = vmax.f32 %v816, 0.0
          %v849 = vmax.f32 %v817, 0.0
          %v850 = vmax.f32 %v818, 0.0
          %v851 = vmax.f32 %v819, 0.0
          %v852 = vmax.f32 %v820, 0.0
          %v853 = vmax.f32 %v821, 0.0
          %v854 = vmax.f32 %v822, 0.0
          %v855 = vmax.f32 %v823, 0.0
          %v856 = vmax.f32 %v824, 0.0
          %v857 = vmax.f32 %v825, 0.0
          %v858 = vmax.f32 %v826, 0.0
          %v859 = vmax.f32 %v827, 0.0
          %v860 = vmax.f32 %v828, 0.0
          %v861 = vmax.f32 %v829, 0.0
          %v862 = vmax.f32 %v830, 0.0
          %v863 = vmax.f32 %v831, 0.0
          %v864 = vmax.f32 %v832, 0.0
          %v865 = vmax.f32 %v833, 0.0
          %v866 = vmax.f32 %v834, 0.0
          %v867 = vmax.f32 %v835, 0.0
          %v868 = vmin.f32 %v836, 6.0
          %v869 = vmin.f32 %v837, 6.0
          %v870 = vmin.f32 %v838, 6.0
          %v871 = vmin.f32 %v839, 6.0
          %v872 = vmin.f32 %v840, 6.0
          %v873 = vmin.f32 %v841, 6.0
          %v874 = vmin.f32 %v842, 6.0
          %v875 = vmin.f32 %v843, 6.0
          %v876 = vmin.f32 %v844, 6.0
          %v877 = vmin.f32 %v845, 6.0
          %v878 = vmin.f32 %v846, 6.0
          %v879 = vmin.f32 %v847, 6.0
          %v880 = vmin.f32 %v848, 6.0
          %v881 = vmin.f32 %v849, 6.0
          %v882 = vmin.f32 %v850, 6.0
          %v883 = vmin.f32 %v851, 6.0
          %v884 = vmin.f32 %v852, 6.0
          %v885 = vmin.f32 %v853, 6.0
          %v886 = vmin.f32 %v854, 6.0
          %v887 = vmin.f32 %v855, 6.0
          %v888 = vmin.f32 %v856, 6.0
          %v889 = vmin.f32 %v857, 6.0
          %v890 = vmin.f32 %v858, 6.0
          %v891 = vmin.f32 %v859, 6.0
          %v892 = vmin.f32 %v860, 6.0
          %v893 = vmin.f32 %v861, 6.0
          %v894 = vmin.f32 %v862, 6.0
          %v895 = vmin.f32 %v863, 6.0
          %v896 = vmin.f32 %v864, 6.0
          %v897 = vmin.f32 %v865, 6.0
          %v898 = vmin.f32 %v866, 6.0
          %v899 = vmin.f32 %v867, 6.0
          %v900 = vmul.f32 %v772, %v868
          %v901 = vmul.f32 %v773, %v869
          %v902 = vmul.f32 %v774, %v870
          %v903 = vmul.f32 %v775, %v871
          %v904 = vmul.f32 %v776, %v872
          %v905 = vmul.f32 %v777, %v873
          %v906 = vmul.f32 %v778, %v874
          %v907 = vmul.f32 %v779, %v875
          %v908 = vmul.f32 %v780, %v876
          %v909 = vmul.f32 %v781, %v877
          %v910 = vmul.f32 %v782, %v878
          %v911 = vmul.f32 %v783, %v879
          %v912 = vmul.f32 %v784, %v880
          %v913 = vmul.f32 %v785, %v881
          %v914 = vmul.f32 %v786, %v882
          %v915 = vmul.f32 %v787, %v883
          %v916 = vmul.f32 %v788, %v884
          %v917 = vmul.f32 %v789, %v885
          %v918 = vmul.f32 %v790, %v886
          %v919 = vmul.f32 %v791, %v887
          %v920 = vmul.f32 %v792, %v888
          %v921 = vmul.f32 %v793, %v889
          %v922 = vmul.f32 %v794, %v890
          %v923 = vmul.f32 %v795, %v891
          %v924 = vmul.f32 %v796, %v892
          %v925 = vmul.f32 %v797, %v893
          %v926 = vmul.f32 %v798, %v894
          %v927 = vmul.f32 %v799, %v895
          %v928 = vmul.f32 %v800, %v896
          %v929 = vmul.f32 %v801, %v897
          %v930 = vmul.f32 %v802, %v898
          %v931 = vmul.f32 %v803, %v899
          %v932 = vmul.f32 %v900, 0.16666667
          %v933 = vmul.f32 %v901, 0.16666667
          %v934 = vmul.f32 %v902, 0.16666667
          %v935 = vmul.f32 %v903, 0.16666667
          %v936 = vmul.f32 %v904, 0.16666667
          %v937 = vmul.f32 %v905, 0.16666667
          %v938 = vmul.f32 %v906, 0.16666667
          %v939 = vmul.f32 %v907, 0.16666667
          %v940 = vmul.f32 %v908, 0.16666667
          %v941 = vmul.f32 %v909, 0.16666667
          %v942 = vmul.f32 %v910, 0.16666667
          %v943 = vmul.f32 %v911, 0.16666667
          %v944 = vmul.f32 %v912, 0.16666667
          %v945 = vmul.f32 %v913, 0.16666667
          %v946 = vmul.f32 %v914, 0.16666667
          %v947 = vmul.f32 %v915, 0.16666667
          %v948 = vmul.f32 %v916, 0.16666667
          %v949 = vmul.f32 %v917, 0.16666667
          %v950 = vmul.f32 %v918, 0.16666667
          %v951 = vmul.f32 %v919, 0.16666667
          %v952 = vmul.f32 %v920, 0.16666667
          %v953 = vmul.f32 %v921, 0.16666667
          %v954 = vmul.f32 %v922, 0.16666667
          %v955 = vmul.f32 %v923, 0.16666667
          %v956 = vmul.f32 %v924, 0.16666667
          %v957 = vmul.f32 %v925, 0.16666667
          %v958 = vmul.f32 %v926, 0.16666667
          %v959 = vmul.f32 %v927, 0.16666667
          %v960 = vmul.f32 %v928, 0.16666667
          %v961 = vmul.f32 %v929, 0.16666667
          %v962 = vmul.f32 %v930, 0.16666667
          %v963 = vmul.f32 %v931, 0.16666667
          %964 = vst [vmem:[%s228] sm:$0xff] %v932
          %965 = vst [vmem:[%s228 + $0x8] sm:$0xff] %v933
          %966 = vst [vmem:[%s228 + $0x10] sm:$0xff] %v934
          %967 = vst [vmem:[%s228 + $0x18] sm:$0xff] %v935
          %968 = vst [vmem:[%s228 + $0x20] sm:$0xff] %v936
          %969 = vst [vmem:[%s228 + $0x28] sm:$0xff] %v937
          %970 = vst [vmem:[%s228 + $0x30] sm:$0xff] %v938
          %971 = vst [vmem:[%s228 + $0x38] sm:$0xff] %v939
          %972 = vst [vmem:[%s228 + $0x40] sm:$0xff] %v940
          %973 = vst [vmem:[%s228 + $0x48] sm:$0xff] %v941
          %974 = vst [vmem:[%s228 + $0x50] sm:$0xff] %v942
          %975 = vst [vmem:[%s228 + $0x58] sm:$0xff] %v943
          %976 = vst [vmem:[%s228 + $0x60] sm:$0xff] %v944
          %977 = vst [vmem:[%s228 + $0x68] sm:$0xff] %v945
          %978 = vst [vmem:[%s228 + $0x70] sm:$0xff] %v946
          %979 = vst [vmem:[%s228 + $0x78] sm:$0xff] %v947
          %980 = vst [vmem:[%s228 + $0x80] sm:$0xff] %v948
          %981 = vst [vmem:[%s228 + $0x88] sm:$0xff] %v949
          %982 = vst [vmem:[%s228 + $0x90] sm:$0xff] %v950
          %983 = vst [vmem:[%s228 + $0x98] sm:$0xff] %v951
          %984 = vst [vmem:[%s228 + $0xa0] sm:$0xff] %v952
          %985 = vst [vmem:[%s228 + $0xa8] sm:$0xff] %v953
          %986 = vst [vmem:[%s228 + $0xb0] sm:$0xff] %v954
          %987 = vst [vmem:[%s228 + $0xb8] sm:$0xff] %v955
          %988 = vst [vmem:[%s228 + $0xc0] sm:$0xff] %v956
          %989 = vst [vmem:[%s228 + $0xc8] sm:$0xff] %v957
          %990 = vst [vmem:[%s228 + $0xd0] sm:$0xff] %v958
          %991 = vst [vmem:[%s228 + $0xd8] sm:$0xff] %v959
          %992 = vst [vmem:[%s228 + $0xe0] sm:$0xff] %v960
          %993 = vst [vmem:[%s228 + $0xe8] sm:$0xff] %v961
          %994 = vst [vmem:[%s228 + $0xf0] sm:$0xff] %v962
          %995 = vst [vmem:[%s228 + $0xf8] sm:$0xff] %v963
        $region40: #{tpu_custom_call.1} parent=31 // pred_fallthru
          _
        %s996 = sand.u32 %s128, 1
        %s997 = scalar_lea.sflag [#allocation4], %s996
        %s998 = sand.u32 %s128, 1
        %s999 = smul.addr %s998, 256
        %s1000 = scalar_lea.vmem [#allocation3], %s999
        // Predicated region
        $region41: #{tpu_custom_call.1} parent=31 // pred_check
          %p1001 = pneg %p138
        $region42: #{tpu_custom_call.1} parent=31 // pred_check_branch
          %1003 = sbr.rel (%p1001) target = $region44
        $region43: #{tpu_custom_call.1} parent=31 // pred_region
          %s1004 = smul.u32 32, %s22
          %s1006 = ssub.s32 4096, 4096
          %1007 = vsyncadd %s997, %s1006
          %s1008 = sadd.s32 %s23, %s1004
          %s1009 = smul.addr %s1008, 128
          %s1010 = scalar_lea.hbm %s3, %s1009
          %s1011 = sshll.u32 %s1000, 4
          %s1012 = int_to_ptr.vmem [resolvable:$true] %s1011
          %1017 = dma.vmem_to_hbm [thread:$0]  %s1012, 4096, %s1010, %s997, 128, 128, 8
        $region44: #{tpu_custom_call.1} parent=31 // pred_fallthru
          _
      $region32: #{tpu_custom_call.1} parent=5 // pred_fallthru
        _
      %p1018 = scmp.le.s32.totalorder 2, %s12
      // Predicated region
      $region45: #{tpu_custom_call.1} parent=5 // pred_check
        %p1019 = pneg %p1018
      $region46: #{tpu_custom_call.1} parent=5 // pred_check_branch
        %1021 = sbr.rel (%p1019) target = $region48
      $region47: #{tpu_custom_call.1} parent=5 // pred_region
        %s1022 = ssub.s32 %s12, 2
        // Predicated region
        $region49: #{tpu_custom_call.1} parent=47 // pred_check
          %p1023 = pneg %p144
        $region50: #{tpu_custom_call.1} parent=47 // pred_check_branch
          %1025 = sbr.rel (%p1023) target = $region52
        $region51: #{tpu_custom_call.1} parent=47 // pred_region
          %s1026 = sand.u32 %s129, 1
          %s1027 = scalar_lea.sflag [#allocation4], %s1026
          %s1028 = sand.u32 %s129, 1
          %s1029 = smul.addr %s1028, 256
          %s1030 = scalar_lea.vmem [#allocation3], %s1029
          %1031 = dma.done %s1027, 4096
        $region52: #{tpu_custom_call.1} parent=47 // pred_fallthru
          _
      $region48: #{tpu_custom_call.1} parent=5 // pred_fallthru
        _
    $region6: #{tpu_custom_call.1} parent=1 // loop_footer
      %s16 = sadd.s32 1, %s12
    $region7: #{tpu_custom_call.1} parent=1 // loop_footer_branch
      %11 = sbr.rel target = $region3
    $region8: #{tpu_custom_call.1} parent=1 // loop_exit
      _
    %1032 = vsyncpa [#allocation4], 1
    %s1033 = scalar_lea.sflag [#allocation4], 1
    %1034 = vsyncpa %s1033, 1

</llo_original>
